<compile_context>
chip_gen: v7x
topology: tpu7x:2x2x1
jax: 0.10.0
libtpu: 0.0.40
codegen_flags: <defaults>
</compile_context>

<pallas_src>
import jax
import jax.numpy as jnp
from jax.experimental import pallas as pl
from jax.experimental.pallas import tpu as pltpu


def linear_kernel(x_ref, w_ref, b_ref, o_ref):
    # x_ref: (ndim, tn) VMEM tile -- rows of x on the lane axis (lane-dense)
    # w_ref: (ndim, 1)  VMEM tile -- broadcast across lanes by the VPU
    # b_ref: (1,) SMEM  -- scalar bias
    # o_ref: (1, tn)    -- lane-dense output slab
    prod = x_ref[...] * w_ref[...]                 # VPU elementwise multiply
    acc = jnp.sum(prod, axis=0, keepdims=True)     # XLU sublane reduce -> (1, tn)
    o_ref[...] = (acc + b_ref[0]).astype(o_ref.dtype)


def linear_forward(x, weight, bias, *, tn=1024):
    """x: (N, ndim), weight: (ndim, 1), bias: (1,) -> (N, 1)

    tn: lane-tile of rows per grid step (rounded to a multiple of 128).
        Per-tile VMEM is only ndim * tn * 4 bytes, so the default is safe on
        v5e (16 MiB scoped), v6e (32 MiB) and v7x (32 MiB scoped / 64 MiB).
    """
    N, ndim = x.shape

    # Layout plumbing (outside the kernel): rows -> lanes.
    x_t = x.T  # (ndim, N)

    # Tile size: multiple of 128 lanes, no larger than the padded problem.
    tn = max(128, (tn // 128) * 128)
    n_pad = pl.cdiv(N, tn) * tn
    if n_pad > N:
        # Zero padding: 0 * w + bias lands only in columns we slice off below.
        x_t = jnp.pad(x_t, ((0, 0), (0, n_pad - N)))

    grid = (n_pad // tn,)

    out = pl.pallas_call(
        linear_kernel,
        out_shape=jax.ShapeDtypeStruct((1, n_pad), x.dtype),
        grid=grid,
        in_specs=[
            # x tile: full ndim on sublanes, tn rows on lanes.
            pl.BlockSpec((ndim, tn), lambda i: (0, i)),
            # weight: tiny, same block for every grid step.
            pl.BlockSpec((ndim, 1), lambda i: (0, 0)),
            # bias: scalar in SMEM, no VMEM tile / DMA.
            pl.BlockSpec(memory_space=pltpu.MemorySpace.SMEM),
        ],
        out_specs=pl.BlockSpec((1, tn), lambda i: (0, i)),
        compiler_params=pltpu.CompilerParams(
            dimension_semantics=("parallel",),
        ),
    )(x_t, weight, bias)

    # Back to PyTorch's (N, 1) shape.
    return out[0, :N].reshape(N, 1)


if __name__ == "__main__":
    # Shapes consistent with the module's example: x = torch.randn(4, 5), ndim = 5.
    N, ndim = 4, 5
    key = jax.random.PRNGKey(0)
    kx, kw, kb = jax.random.split(key, 3)

    x = jax.random.normal(kx, (N, ndim), dtype=jnp.float32)
    weight = jax.random.normal(kw, (ndim, 1), dtype=jnp.float32)   # nn.Parameter(torch.randn(ndim, 1))
    bias = jax.random.normal(kb, (1,), dtype=jnp.float32)          # nn.Parameter(torch.randn(1))

    y = linear_forward(x, weight, bias)
    y = jax.block_until_ready(y)

    # Pure-JAX reference check of the forward semantics.
    y_ref = x @ weight + bias
    assert y.shape == (N, 1)
    assert jnp.allclose(y, y_ref, atol=1e-5, rtol=1e-5)

    print("KERNEL_OK")
</pallas_src>

<mosaic_0001>
module attributes {stable_mosaic.version = 11 : i64} {
  func.func @linear_kernel(%arg0: i32, %arg1: memref<5x1024xf32, #tpu.memory_space<vmem>>, %arg2: memref<5x1xf32, #tpu.memory_space<vmem>>, %arg3: memref<1xf32, #tpu.memory_space<smem>>, %arg4: memref<1x1024xf32, #tpu.memory_space<vmem>>) attributes {dimension_semantics = [#tpu.dimension_semantics<parallel>], iteration_bounds = array<i64: 1>, scalar_prefetch = 0 : i64, scratch_operands = 0 : i64, tpu.core_type = #tpu.core_type<tc>, window_params = [{transform_indices = @transform_0, window_bounds = array<i64: 5, 1024>}, {pipeline_mode = #tpu.pipeline_mode<synchronous>, transform_indices = @transform_1, window_bounds = array<i64: 5, 1>}, {transform_indices = @transform_2, window_bounds = array<i64: 1>}, {transform_indices = @transform_3, window_bounds = array<i64: 1, 1024>}]} {
    %c0 = arith.constant 0 : index
    %c0_0 = arith.constant 0 : index
    %0 = vector.load %arg1[%c0, %c0_0] : memref<5x1024xf32, #tpu.memory_space<vmem>>, vector<5x1024xf32>
    %c0_1 = arith.constant 0 : index
    %c0_2 = arith.constant 0 : index
    %1 = vector.load %arg2[%c0_1, %c0_2] : memref<5x1xf32, #tpu.memory_space<vmem>>, vector<5x1xf32>
    %2 = vector.broadcast %1 : vector<5x1xf32> to vector<5x1024xf32>
    %3 = arith.mulf %0, %2 : vector<5x1024xf32>
    %cst = arith.constant dense<0.000000e+00> : vector<1024xf32>
    %4 = vector.multi_reduction <add>, %3, %cst [0] : vector<5x1024xf32> to vector<1024xf32>
    %5 = vector.shape_cast %4 : vector<1024xf32> to vector<1x1024xf32>
    %c0_3 = arith.constant 0 : index
    %6 = memref.load %arg3[%c0_3] : memref<1xf32, #tpu.memory_space<smem>>
    %7 = vector.broadcast %6 : f32 to vector<1x1024xf32>
    %8 = arith.addf %5, %7 : vector<1x1024xf32>
    %c0_4 = arith.constant 0 : index
    %c0_5 = arith.constant 0 : index
    %9 = vector.load %arg4[%c0_4, %c0_5] : memref<1x1024xf32, #tpu.memory_space<vmem>>, vector<1x1024xf32>
    tpu.vector_store %arg4[%c0_4, %c0_5], %8 {strides = array<i32>} : memref<1x1024xf32, #tpu.memory_space<vmem>>, vector<1x1024xf32>,
    return
  }
  func.func @transform_0(%arg0: i32) -> (i32, i32) {
    %c0_i32 = arith.constant 0 : i32
    %c0_i32_0 = arith.constant 0 : i32
    return %c0_i32, %arg0 : i32, i32
  }
  func.func @transform_1(%arg0: i32) -> (i32, i32) {
    %c0_i32 = arith.constant 0 : i32
    %c0_i32_0 = arith.constant 0 : i32
    %c0_i32_1 = arith.constant 0 : i32
    return %c0_i32, %c0_i32_0 : i32, i32
  }
  func.func @transform_2(%arg0: i32) -> i32 {
    %c0_i32 = arith.constant 0 : i32
    %c0_i32_0 = arith.constant 0 : i32
    return %c0_i32 : i32
  }
  func.func @transform_3(%arg0: i32) -> (i32, i32) {
    %c0_i32 = arith.constant 0 : i32
    %c0_i32_0 = arith.constant 0 : i32
    return %c0_i32, %arg0 : i32, i32
  }
}

</mosaic_0001>

<llo_original>
// kernel: tpu_custom_call.1
$region0: #{tpu_custom_call.1}
  #allocation0 [shape = 'u32[]', space=smem, size = 0x4, offset = 0x4, fixed_abs, tag = 'smem constant byte address 0x4 - core index']
  #allocation1 [shape = 'u32[144,128]{1,0:T(1,128)}', space=vmem, size = 0x12000, scoped, tag = 'internal scratch']
  #allocation2 [shape = 'f32[1]{0:T(128)S(6)}', space=smem, size = 0x200, scoped, tag = 'scoped memory for tpu_custom_call.1']
  %s0 = inlined_call_operand.hbm [shape: f32[5,1024], index: 0, kind: input, shape index: {}]
  %s1 = inlined_call_operand.vmem [shape: f32[5,1], index: 1, kind: input, shape index: {}]
  %s2 = inlined_call_operand.<no memory space> [shape: f32[1], index: 2, kind: input, shape index: {}]
  %s3 = inlined_call_operand.hbm [shape: f32[1,1024], index: 3, kind: output, shape index: {}]
  %s4 = sld [smem:[#allocation0]]
  $region26: #{tpu_custom_call.1} parent=0
    _
  %s6 = ssub.s32 1, %s4
  %s7 = scalar_select 0, %s6, %s4
  %8 = sst [smem:[#allocation2]] %s2
  $region1: #{tpu_custom_call.1} parent=0
    #allocation3 [shape = 'u8[32768]{0}', space=vmem, size = 0x8000, scoped, tag = 'input window, operand 0, single buffered']
    #allocation4 [shape = 's32[1]{0}', space=sflag, size = 0x4, scoped, tag = 'scoped memory for tpu_custom_call.1']
    #allocation5 [shape = 's32[1]{0}', space=sflag, size = 0x4, scoped, tag = 'scoped memory for tpu_custom_call.1']
    #allocation6 [shape = 'u8[4096]{0}', space=vmem, size = 0x1000, scoped, tag = 'output window, operand 0, single buffered']
    %9 = vsyncpa [#allocation4], 0
    %10 = vsyncpa [#allocation5], 0
    // Predicated region
    $region2: #{tpu_custom_call.1} parent=1 // pred_check
      _
    $region3: #{tpu_custom_call.1} parent=1 // pred_check_branch
      %12 = sbr.rel (0) target = $region5
    $region4: #{tpu_custom_call.1} parent=1 // pred_region
      %s14 = ssub.s32 1024, 1024
      %15 = vsyncadd [#allocation4], %s14
      %s17 = sshll.u32 [#allocation3], 4
      %s18 = int_to_ptr.vmem [resolvable:$true] %s17
      %20 = dma.hbm_to_vmem [thread:$0]  %s0, 1024, %s18, [#allocation4]
    $region5: #{tpu_custom_call.1} parent=1 // pred_fallthru
      _
    // Predicated region
    $region6: #{tpu_custom_call.1} parent=1 // pred_check
      _
    $region7: #{tpu_custom_call.1} parent=1 // pred_check_branch
      %22 = sbr.rel (0) target = $region9
    $region8: #{tpu_custom_call.1} parent=1 // pred_region
      _
    $region9: #{tpu_custom_call.1} parent=1 // pred_fallthru
      _
    // Predicated region
    $region10: #{tpu_custom_call.1} parent=1 // pred_check
      _
    $region11: #{tpu_custom_call.1} parent=1 // pred_check_branch
      %24 = sbr.rel (0) target = $region13
    $region12: #{tpu_custom_call.1} parent=1 // pred_region
      _
    $region13: #{tpu_custom_call.1} parent=1 // pred_fallthru
      _
    // Predicated region
    $region14: #{tpu_custom_call.1} parent=1 // pred_check
      _
    $region15: #{tpu_custom_call.1} parent=1 // pred_check_branch
      %26 = sbr.rel (0) target = $region17
    $region16: #{tpu_custom_call.1} parent=1 // pred_region
      %27 = dma.done [#allocation4], 1024
    $region17: #{tpu_custom_call.1} parent=1 // pred_fallthru
      _
    %v28 = vld [vmem:[#allocation3] sm:$0x1f]
    %v29 = vld [vmem:[#allocation3 + $0x8] sm:$0x1f]
    %v30 = vld [vmem:[#allocation3 + $0x10] sm:$0x1f]
    %v31 = vld [vmem:[#allocation3 + $0x18] sm:$0x1f]
    %v32 = vld [vmem:[#allocation3 + $0x20] sm:$0x1f]
    %v33 = vld [vmem:[#allocation3 + $0x28] sm:$0x1f]
    %v34 = vld [vmem:[#allocation3 + $0x30] sm:$0x1f]
    %v35 = vld [vmem:[#allocation3 + $0x38] sm:$0x1f]
    %v36 = vld [vmem:[%s1] sm:$0x1f]
    %38 = vset.pattern.permute.xlu0 0
    %39 = vperm.xlu0 %38, %v36
    %v40 = vpop.permute.xlu0 %39
    %v42 = vmul.f32 %v28, %v40
    %v43 = vmul.f32 %v29, %v40
    %v44 = vmul.f32 %v30, %v40
    %v45 = vmul.f32 %v31, %v40
    %v46 = vmul.f32 %v32, %v40
    %v47 = vmul.f32 %v33, %v40
    %v48 = vmul.f32 %v34, %v40
    %v49 = vmul.f32 %v35, %v40
    %vm50 = vcmask 1044480
    %v51 = vsel %vm50, %v42, 0.0
    %v52 = vrot.slane %v51, 4
    %v53 = vadd.f32 %v51, %v52
    %v54 = vrot.slane %v53, 2
    %v55 = vadd.f32 %v53, %v54
    %v56 = vrot.slane %v55, 1
    %v57 = vadd.f32 %v55, %v56
    %v58 = vsel %vm50, %v43, 0.0
    %v59 = vrot.slane %v58, 4
    %v60 = vadd.f32 %v58, %v59
    %v61 = vrot.slane %v60, 2
    %v62 = vadd.f32 %v60, %v61
    %v63 = vrot.slane %v62, 1
    %v64 = vadd.f32 %v62, %v63
    %v65 = vsel %vm50, %v44, 0.0
    %v66 = vrot.slane %v65, 4
    %v67 = vadd.f32 %v65, %v66
    %v68 = vrot.slane %v67, 2
    %v69 = vadd.f32 %v67, %v68
    %v70 = vrot.slane %v69, 1
    %v71 = vadd.f32 %v69, %v70
    %v72 = vsel %vm50, %v45, 0.0
    %v73 = vrot.slane %v72, 4
    %v74 = vadd.f32 %v72, %v73
    %v75 = vrot.slane %v74, 2
    %v76 = vadd.f32 %v74, %v75
    %v77 = vrot.slane %v76, 1
    %v78 = vadd.f32 %v76, %v77
    %v79 = vsel %vm50, %v46, 0.0
    %v80 = vrot.slane %v79, 4
    %v81 = vadd.f32 %v79, %v80
    %v82 = vrot.slane %v81, 2
    %v83 = vadd.f32 %v81, %v82
    %v84 = vrot.slane %v83, 1
    %v85 = vadd.f32 %v83, %v84
    %v86 = vsel %vm50, %v47, 0.0
    %v87 = vrot.slane %v86, 4
    %v88 = vadd.f32 %v86, %v87
    %v89 = vrot.slane %v88, 2
    %v90 = vadd.f32 %v88, %v89
    %v91 = vrot.slane %v90, 1
    %v92 = vadd.f32 %v90, %v91
    %v93 = vsel %vm50, %v48, 0.0
    %v94 = vrot.slane %v93, 4
    %v95 = vadd.f32 %v93, %v94
    %v96 = vrot.slane %v95, 2
    %v97 = vadd.f32 %v95, %v96
    %v98 = vrot.slane %v97, 1
    %v99 = vadd.f32 %v97, %v98
    %v100 = vsel %vm50, %v49, 0.0
    %v101 = vrot.slane %v100, 4
    %v102 = vadd.f32 %v100, %v101
    %v103 = vrot.slane %v102, 2
    %v104 = vadd.f32 %v102, %v103
    %v105 = vrot.slane %v104, 1
    %v106 = vadd.f32 %v104, %v105
    %s107 = sld [smem:[#allocation2]]
    %v108 = vstv %s107
    %v109 = vadd.f32 %v57, %v108
    %v110 = vadd.f32 %v64, %v108
    %v111 = vadd.f32 %v71, %v108
    %v112 = vadd.f32 %v78, %v108
    %v113 = vadd.f32 %v85, %v108
    %v114 = vadd.f32 %v92, %v108
    %v115 = vadd.f32 %v99, %v108
    %v116 = vadd.f32 %v106, %v108
    %v125 = vcombine.low %v109, %v110
    %v126 = vcombine.low %v111, %v112
    %v127 = vcombine.low %v113, %v114
    %v128 = vcombine.low %v115, %v116
    %v130 = vunpack.c.l.s4 1966171168
    %v131 = vunpack.c.0.s8 %v130
    %v132 = vlaneseq
    %v133 = vshrl.u32 %v132, 7
    %v134 = vsub.s32 %v131, %v133
    %v135 = vrot.slane %v125, %v134
    %v137 = vunpack.c.l.s4 1966171168
    %v138 = vunpack.c.0.s8 %v137
    %v139 = vlaneseq
    %v140 = vshrl.u32 %v139, 7
    %v141 = vsub.s32 %v138, %v140
    %v142 = vrot.slane %v126, %v141
    %v144 = vunpack.c.l.s4 1966171168
    %v145 = vunpack.c.0.s8 %v144
    %v146 = vlaneseq
    %v147 = vshrl.u32 %v146, 7
    %v148 = vsub.s32 %v145, %v147
    %v149 = vrot.slane %v127, %v148
    %v151 = vunpack.c.l.s4 1966171168
    %v152 = vunpack.c.0.s8 %v151
    %v153 = vlaneseq
    %v154 = vshrl.u32 %v153, 7
    %v155 = vsub.s32 %v152, %v154
    %v156 = vrot.slane %v128, %v155
    %v157 = vcombine.low %v135, %v142
    %v158 = vcombine.low %v149, %v156
    %v160 = vunpack.c.l.s4 1966171168
    %v161 = vunpack.c.0.s8 %v160
    %v162 = vlaneseq
    %v163 = vshrl.u32 %v162, 7
    %v164 = vsub.s32 %v161, %v163
    %v165 = vrot.slane %v157, %v164
    %v167 = vunpack.c.l.s4 1966171168
    %v168 = vunpack.c.0.s8 %v167
    %v169 = vlaneseq
    %v170 = vshrl.u32 %v169, 7
    %v171 = vsub.s32 %v168, %v170
    %v172 = vrot.slane %v158, %v171
    %v173 = vcombine.low %v165, %v172
    %175 = vst [vmem:[#allocation6] sm:$0xff] %v173
    // Predicated region
    $region18: #{tpu_custom_call.1} parent=1 // pred_check
      _
    $region19: #{tpu_custom_call.1} parent=1 // pred_check_branch
      %177 = sbr.rel (0) target = $region21
    $region20: #{tpu_custom_call.1} parent=1 // pred_region
      %s179 = ssub.s32 128, 128
      %180 = vsyncadd [#allocation5], %s179
      %s182 = sshll.u32 [#allocation6], 4
      %s183 = int_to_ptr.vmem [resolvable:$true] %s182
      %185 = dma.vmem_to_hbm [thread:$0]  %s183, 128, %s3, [#allocation5]
    $region21: #{tpu_custom_call.1} parent=1 // pred_fallthru
      _
    // Predicated region
    $region22: #{tpu_custom_call.1} parent=1 // pred_check
      _
    $region23: #{tpu_custom_call.1} parent=1 // pred_check_branch
      %187 = sbr.rel (0) target = $region25
    $region24: #{tpu_custom_call.1} parent=1 // pred_region
      %188 = dma.done [#allocation5], 128
    $region25: #{tpu_custom_call.1} parent=1 // pred_fallthru
      _
    %189 = vsyncpa [#allocation4], 1
    %190 = vsyncpa [#allocation5], 1

</llo_original>
